<compile_context>
chip_gen: v7x
topology: tpu7x:2x2x1
jax: 0.10.0
libtpu: 0.0.40
codegen_flags: <defaults>
</compile_context>

<pallas_src>
import functools
import math

import jax
import jax.numpy as jnp
from jax.experimental import pallas as pl
from jax.experimental.pallas import tpu as pltpu

EMBED = 128            # self.embedding_size (Gaussian-Fourier frequencies)
HID_RAW = 64           # true hidden width of lin1 / lin2
HID = 128              # zero-padded hidden width (lane-dense)
OUT_PAD = 8            # lin3 has 6 outputs; padded to 8 (tiny masked store, OK)
TM_CAP = 2048          # max rows per grid step (way under VMEM on all gens)


def _round_up(x, m):
    return ((x + m - 1) // m) * m


def _device_kind():
    try:
        return jax.devices()[0].device_kind.lower()
    except Exception:  # pragma: no cover - defensive (e.g. no backend yet)
        return ""


# ------------------------- in-kernel math helpers ---------------------------

def _gelu(x, use_bf16_tanh):
    # tanh-approximate GELU: the tanh goes to the otherwise-idle EUP slot.
    # (Differs from torch.nn.GELU() exact-erf by ~1e-3 worst case.)
    # On v6e/v7x the (bounded) tanh argument is evaluated in bf16 for ~2x EUP
    # throughput; everything else stays f32.
    c = 0.7978845608028654  # sqrt(2/pi)
    u = c * (x + 0.044715 * (x * x * x))
    if use_bf16_tanh:
        t = jnp.tanh(u.astype(jnp.bfloat16)).astype(jnp.float32)
    else:
        t = jnp.tanh(u)
    return 0.5 * x * (1.0 + t)


def _mlp_tail(h, w2_ref, b2_ref, w3_ref, b3_ref, out_ref, use_bf16_eup):
    wdt = w2_ref.dtype  # bf16 weights; f32 accumulation via preferred_element_type
    h = _gelu(h, use_bf16_eup)
    h = (jnp.dot(h.astype(wdt), w2_ref[...], preferred_element_type=jnp.float32)
         + b2_ref[...])                                   # (TM, 128)
    h = _gelu(h, use_bf16_eup)
    out_ref[...] = (jnp.dot(h.astype(wdt), w3_ref[...],
                            preferred_element_type=jnp.float32)
                    + b3_ref[...]).astype(out_ref.dtype)  # (TM, 8), cols 6..7 zero


# ------------------------------ Pallas kernels -------------------------------

def _pose_mlp_kernel_merged(cam_ref, b_ref, w1_ref, b1_ref,
                            w2_ref, b2_ref, w3_ref, b3_ref, out_ref,
                            *, use_bf16_eup):
    # v6e / v7x: single K=256 first-layer dot (full MXU depth, one weight pass).
    arg = cam_ref[...] * b_ref[...]                       # (TM,1)*(1,128)->(TM,128)
    # [sin || cos] concat is 128-lane tile-aligned placement, not a shuffle.
    sc = jnp.concatenate([jnp.sin(arg), jnp.cos(arg)], axis=-1)   # (TM, 256) f32
    wdt = w1_ref.dtype
    h = (jnp.dot(sc.astype(wdt), w1_ref[...], preferred_element_type=jnp.float32)
         + b1_ref[...])                                   # (TM, 128)
    _mlp_tail(h, w2_ref, b2_ref, w3_ref, b3_ref, out_ref, use_bf16_eup)


def _pose_mlp_kernel_split(cam_ref, b_ref, w1s_ref, w1c_ref, b1_ref,
                           w2_ref, b2_ref, w3_ref, b3_ref, out_ref,
                           *, use_bf16_eup):
    # v5e: MXU is 128-deep, keep two K=128 dots into the same f32 accumulator.
    arg = cam_ref[...] * b_ref[...]                       # (TM, 128) f32
    wdt = w1s_ref.dtype
    h = (jnp.dot(jnp.sin(arg).astype(wdt), w1s_ref[...],
                 preferred_element_type=jnp.float32)
         + jnp.dot(jnp.cos(arg).astype(wdt), w1c_ref[...],
                   preferred_element_type=jnp.float32)
         + b1_ref[...])                                   # (TM, 128)
    _mlp_tail(h, w2_ref, b2_ref, w3_ref, b3_ref, out_ref, use_bf16_eup)


# ------------------------------ wrapper --------------------------------------

def _choose_tile(n, multi_tc):
    """Rows per grid step.  One tile on 1-TC chips; two tiles on v7x when N>8."""
    n8 = _round_up(max(n, 1), 8)
    if multi_tc and n8 >= 16:
        tm = _round_up(pl.cdiv(n8, 2), 8)
    else:
        tm = n8
    return min(TM_CAP, tm)


def pose_mlp(cam_ids_f32, params):
    """cam_ids_f32: (N,) float32 camera ids; returns (N, 6) float32 predictions."""
    cam = jnp.asarray(cam_ids_f32, dtype=jnp.float32).reshape(-1, 1)
    n = cam.shape[0]

    kind = _device_kind()
    is_v5 = "v5" in kind
    multi_tc = "v7" in kind          # v7x: 2 TensorCores per chip
    use_bf16_eup = not is_v5         # bf16 EUP exists on v6e / v7x only

    tm = _choose_tile(n, multi_tc)
    n_pad = _round_up(_round_up(n, 8), tm)
    if n_pad != n:
        cam = jnp.pad(cam, ((0, n_pad - n), (0, 0)))

    b2pi, w1, b1, w2, b2, w3, b3 = params
    const = lambda i: (0, 0)          # weights resident in VMEM across grid steps

    if is_v5:
        kernel = functools.partial(_pose_mlp_kernel_split,
                                   use_bf16_eup=use_bf16_eup)
        w1_args = (w1[:EMBED], w1[EMBED:])
        w1_specs = [pl.BlockSpec((EMBED, HID), const),     # w1_sin
                    pl.BlockSpec((EMBED, HID), const)]     # w1_cos
    else:
        kernel = functools.partial(_pose_mlp_kernel_merged,
                                   use_bf16_eup=use_bf16_eup)
        w1_args = (w1,)
        w1_specs = [pl.BlockSpec((2 * EMBED, HID), const)]  # merged [sin;cos] weight

    out = pl.pallas_call(
        kernel,
        out_shape=jax.ShapeDtypeStruct((n_pad, OUT_PAD), jnp.float32),
        grid_spec=pltpu.PrefetchScalarGridSpec(
            num_scalar_prefetch=0,
            grid=(n_pad // tm,),
            in_specs=[
                pl.BlockSpec((tm, 1), lambda i: (i, 0)),        # camera ids
                pl.BlockSpec((1, EMBED), const),                # 2*pi*b  (f32)
                *w1_specs,                                      # lin1 weight(s), bf16
                pl.BlockSpec((1, HID), const),                  # b1 (f32)
                pl.BlockSpec((HID, HID), const),                # w2 (bf16)
                pl.BlockSpec((1, HID), const),                  # b2 (f32)
                pl.BlockSpec((HID, OUT_PAD), const),            # w3 (bf16)
                pl.BlockSpec((1, OUT_PAD), const),              # b3 (f32)
            ],
            out_specs=pl.BlockSpec((tm, OUT_PAD), lambda i: (i, 0)),
        ),
        compiler_params=pltpu.CompilerParams(
            dimension_semantics=("parallel",)),     # shards the (<=2) row tiles on v7x
    )(cam, b2pi, *w1_args, b1, w2, b2, w3, b3)
    return out[:n, :6]


# ------------------------------ JAX glue -------------------------------------

def _vec2skew(v):                                       # (N,3) -> (N,3,3)
    o = jnp.zeros_like(v[:, 0])
    return jnp.stack([
        jnp.stack([o, -v[:, 2], v[:, 1]], axis=-1),
        jnp.stack([v[:, 2], o, -v[:, 0]], axis=-1),
        jnp.stack([-v[:, 1], v[:, 0], o], axis=-1),
    ], axis=-2)


def batch_make_c2w(r, t):
    # TODO(synk): batch_make_c2w is not defined in the provided source; using the
    # standard NeRFmm axis-angle (Rodrigues exponential map) + translation build.
    skew = _vec2skew(r)                                 # (N,3,3)
    theta = jnp.linalg.norm(r, axis=-1)[:, None, None] + 1e-15
    eye = jnp.eye(3, dtype=r.dtype)[None]
    R = (eye
         + (jnp.sin(theta) / theta) * skew
         + ((1.0 - jnp.cos(theta)) / (theta ** 2)) * (skew @ skew))
    top = jnp.concatenate([R, t[:, :, None]], axis=-1)  # (N,3,4)
    bottom = jnp.broadcast_to(
        jnp.array([[[0.0, 0.0, 0.0, 1.0]]], dtype=r.dtype), (r.shape[0], 1, 4))
    return jnp.concatenate([top, bottom], axis=1)       # (N,4,4)


def learn_pose_gf_forward_batched(cam_ids, params, init_c2w=None, small_rot=False):
    """Vectorized LearnPoseGF.forward over many camera ids (emphasize_rot=False)."""
    cam_ids = jnp.asarray(cam_ids, dtype=jnp.int32)
    pred = pose_mlp(cam_ids.astype(jnp.float32), params)     # (N, 6), one pallas_call
    rot_scale = math.pi / 6.0 if small_rot else math.pi
    c2w = batch_make_c2w(pred[:, :3] * rot_scale, pred[:, 3:])  # (N,4,4)
    if init_c2w is not None:
        init = init_c2w[cam_ids]                              # (N,4,4)
        # Mirrors the original's tmp = eye(4); tmp[:3,3]=t; tmp[:3,:3]=R rebuild.
        tmp = jnp.broadcast_to(jnp.eye(4, dtype=c2w.dtype), init.shape)
        tmp = tmp.at[:, :3, 3].set(init[:, :3, 3])
        tmp = tmp.at[:, :3, :3].set(init[:, :3, :3])
        c2w = jnp.einsum('nij,njk->nik', c2w, tmp)
    return c2w


def learn_pose_gf_forward(cam_id, params, init_c2w=None, small_rot=False):
    """Mirrors LearnPoseGF.forward(cam_id) -> (4,4) c2w.
    Prefer the batched path for many cameras (this workload is launch-bound)."""
    return learn_pose_gf_forward_batched(
        jnp.asarray([cam_id]), params, init_c2w=init_c2w, small_rot=small_rot)[0]


def init_params(key, embedding_scale=10.0):
    ks = jax.random.split(key, 4)
    # b ~ N(0, embedding_scale), shape (128, 1); kernel uses the (1,128) row 2*pi*b.T.
    b2pi = (2.0 * math.pi) * (embedding_scale * jax.random.normal(ks[0], (EMBED, 1))).T

    def lin_init(k, fan_in, fan_out):
        # deterministic stand-in for PyTorch's default kaiming-uniform init
        lim = 1.0 / math.sqrt(fan_in)
        kw, kb = jax.random.split(k)
        w = jax.random.uniform(kw, (fan_in, fan_out), minval=-lim, maxval=lim)
        bias = jax.random.uniform(kb, (1, fan_out), minval=-lim, maxval=lim)
        return w, bias

    w1, b1 = lin_init(ks[1], 2 * EMBED, HID_RAW)        # (256, 64), (1, 64)
    w2, b2 = lin_init(ks[2], HID_RAW, HID_RAW)          # (64, 64),  (1, 64)
    # lin3: weight ~ N(0, 0.01), bias = 0
    w3 = 0.01 * jax.random.normal(ks[3], (HID_RAW, 6))  # (64, 6)

    ff_scale = 1.0 / math.sqrt(float(EMBED))            # 1/||a|| folded into w1

    def pad_cols(x, n):
        return jnp.pad(x, ((0, 0), (0, n - x.shape[1])))

    def pad_rows(x, n):
        return jnp.pad(x, ((0, n - x.shape[0]), (0, 0)))

    w1p = pad_cols(ff_scale * w1, HID)                  # (256, 128)  [sin rows; cos rows]
    b1p = pad_cols(b1, HID)                             # (1, 128)
    w2p = pad_cols(pad_rows(w2, HID), HID)              # (128, 128)
    b2p = pad_cols(b2, HID)                             # (1, 128)
    w3p = pad_cols(pad_rows(w3, HID), OUT_PAD)          # (128, 8)
    b3p = jnp.zeros((1, OUT_PAD))                       # (1, 8)

    # Weights in bf16 (native MXU rate, half DMA/VMEM); phase row and biases f32.
    bf16, f32 = jnp.bfloat16, jnp.float32
    return (b2pi.astype(f32),
            w1p.astype(bf16), b1p.astype(f32),
            w2p.astype(bf16), b2p.astype(f32),
            w3p.astype(bf16), b3p.astype(f32))


if __name__ == "__main__":
    key = jax.random.PRNGKey(0)
    k_params, k_pose = jax.random.split(key)

    params = init_params(k_params, embedding_scale=10.0)

    # deterministic init_c2w: (num_cams, 4, 4) valid SE(3) poses
    num_cams = 8
    rot0 = 0.1 * jax.random.normal(k_pose, (num_cams, 3))
    trans0 = jax.random.normal(jax.random.fold_in(k_pose, 1), (num_cams, 3))
    init_c2w = batch_make_c2w(rot0, trans0)             # (8, 4, 4)

    # batched path: all cameras through a single pallas_call, fused in one jit
    # with the Rodrigues / compose epilogue (kernel is launch/overhead bound).
    fwd_batched = jax.jit(
        lambda ids: learn_pose_gf_forward_batched(ids, params, init_c2w=init_c2w))
    c2w_all = jax.block_until_ready(fwd_batched(jnp.arange(num_cams)))

    # single-camera path (mirrors LearnPoseGF.forward(cam_id))
    cam_id = 3
    c2w = jax.block_until_ready(
        learn_pose_gf_forward(cam_id, params, init_c2w=init_c2w))

    assert c2w_all.shape == (num_cams, 4, 4) and c2w_all.dtype == jnp.float32
    assert c2w.shape == (4, 4) and c2w.dtype == jnp.float32
    assert bool(jnp.all(jnp.isfinite(c2w_all)))
    assert bool(jnp.all(jnp.isfinite(c2w)))
    assert bool(jnp.allclose(c2w, c2w_all[cam_id], rtol=1e-5, atol=1e-5))
    print("KERNEL_OK")
</pallas_src>

<mosaic_0001>
module attributes {stable_mosaic.version = 11 : i64} {
  func.func @_pose_mlp_kernel_merged(%arg0: i32, %arg1: memref<8x1xf32, #tpu.memory_space<vmem>>, %arg2: memref<1x128xf32, #tpu.memory_space<vmem>>, %arg3: memref<256x128xbf16, #tpu.memory_space<vmem>>, %arg4: memref<1x128xf32, #tpu.memory_space<vmem>>, %arg5: memref<128x128xbf16, #tpu.memory_space<vmem>>, %arg6: memref<1x128xf32, #tpu.memory_space<vmem>>, %arg7: memref<128x8xbf16, #tpu.memory_space<vmem>>, %arg8: memref<1x8xf32, #tpu.memory_space<vmem>>, %arg9: memref<8x8xf32, #tpu.memory_space<vmem>>) attributes {dimension_semantics = [#tpu.dimension_semantics<parallel>], iteration_bounds = array<i64: 1>, scalar_prefetch = 0 : i64, scratch_operands = 0 : i64, tpu.core_type = #tpu.core_type<tc>, window_params = [{transform_indices = @transform_0, window_bounds = array<i64: 8, 1>}, {pipeline_mode = #tpu.pipeline_mode<synchronous>, transform_indices = @transform_1, window_bounds = array<i64: 1, 128>}, {pipeline_mode = #tpu.pipeline_mode<synchronous>, transform_indices = @transform_2, window_bounds = array<i64: 256, 128>}, {pipeline_mode = #tpu.pipeline_mode<synchronous>, transform_indices = @transform_3, window_bounds = array<i64: 1, 128>}, {pipeline_mode = #tpu.pipeline_mode<synchronous>, transform_indices = @transform_4, window_bounds = array<i64: 128, 128>}, {pipeline_mode = #tpu.pipeline_mode<synchronous>, transform_indices = @transform_5, window_bounds = array<i64: 1, 128>}, {pipeline_mode = #tpu.pipeline_mode<synchronous>, transform_indices = @transform_6, window_bounds = array<i64: 128, 8>}, {pipeline_mode = #tpu.pipeline_mode<synchronous>, transform_indices = @transform_7, window_bounds = array<i64: 1, 8>}, {transform_indices = @transform_8, window_bounds = array<i64: 8, 8>}]} {
    %c0 = arith.constant 0 : index
    %c0_0 = arith.constant 0 : index
    %0 = vector.load %arg1[%c0, %c0_0] : memref<8x1xf32, #tpu.memory_space<vmem>>, vector<8x1xf32>
    %c0_1 = arith.constant 0 : index
    %c0_2 = arith.constant 0 : index
    %1 = vector.load %arg2[%c0_1, %c0_2] : memref<1x128xf32, #tpu.memory_space<vmem>>, vector<1x128xf32>
    %2 = vector.broadcast %0 : vector<8x1xf32> to vector<8x128xf32>
    %3 = vector.broadcast %1 : vector<1x128xf32> to vector<8x128xf32>
    %4 = arith.mulf %2, %3 : vector<8x128xf32>
    %5 = math.sin %4 : vector<8x128xf32>
    %6 = math.cos %4 : vector<8x128xf32>
    %7 = tpu.concatenate %5, %6 in 1 : vector<8x128xf32>, vector<8x128xf32> -> vector<8x256xf32>
    %8 = arith.truncf %7 : vector<8x256xf32> to vector<8x256xbf16>
    %c0_3 = arith.constant 0 : index
    %c0_4 = arith.constant 0 : index
    %9 = vector.load %arg3[%c0_3, %c0_4] : memref<256x128xbf16, #tpu.memory_space<vmem>>, vector<256x128xbf16>
    %cst = arith.constant dense<0.000000e+00> : vector<8x128xf32>
    %10 = tpu.matmul %8, %9, %cst {dimension_numbers = #tpu.dot_dimension_numbers<[1], [0], [0], [1], [0, 0, 1, 1], [], []>} : vector<8x256xbf16>, vector<256x128xbf16>, vector<8x128xf32> -> vector<8x128xf32>
    %c0_5 = arith.constant 0 : index
    %c0_6 = arith.constant 0 : index
    %11 = vector.load %arg4[%c0_5, %c0_6] : memref<1x128xf32, #tpu.memory_space<vmem>>, vector<1x128xf32>
    %12 = vector.broadcast %11 : vector<1x128xf32> to vector<8x128xf32>
    %13 = arith.addf %10, %12 : vector<8x128xf32>
    %14 = arith.mulf %13, %13 : vector<8x128xf32>
    %15 = arith.mulf %14, %13 : vector<8x128xf32>
    %cst_7 = arith.constant 4.471500e-02 : f32
    %16 = vector.broadcast %cst_7 : f32 to vector<8x128xf32>
    %17 = arith.mulf %16, %15 : vector<8x128xf32>
    %18 = arith.addf %13, %17 : vector<8x128xf32>
    %cst_8 = arith.constant 0.797884583 : f32
    %19 = vector.broadcast %cst_8 : f32 to vector<8x128xf32>
    %20 = arith.mulf %19, %18 : vector<8x128xf32>
    %21 = arith.truncf %20 : vector<8x128xf32> to vector<8x128xbf16>
    %22 = math.tanh %21 : vector<8x128xbf16>
    %23 = arith.extf %22 : vector<8x128xbf16> to vector<8x128xf32>
    %cst_9 = arith.constant 5.000000e-01 : f32
    %24 = vector.broadcast %cst_9 : f32 to vector<8x128xf32>
    %25 = arith.mulf %24, %13 : vector<8x128xf32>
    %cst_10 = arith.constant 1.000000e+00 : f32
    %26 = vector.broadcast %cst_10 : f32 to vector<8x128xf32>
    %27 = arith.addf %26, %23 : vector<8x128xf32>
    %28 = arith.mulf %25, %27 : vector<8x128xf32>
    %29 = arith.truncf %28 : vector<8x128xf32> to vector<8x128xbf16>
    %c0_11 = arith.constant 0 : index
    %c0_12 = arith.constant 0 : index
    %30 = vector.load %arg5[%c0_11, %c0_12] : memref<128x128xbf16, #tpu.memory_space<vmem>>, vector<128x128xbf16>
    %cst_13 = arith.constant dense<0.000000e+00> : vector<8x128xf32>
    %31 = tpu.matmul %29, %30, %cst_13 {dimension_numbers = #tpu.dot_dimension_numbers<[1], [0], [0], [1], [0, 0, 1, 1], [], []>} : vector<8x128xbf16>, vector<128x128xbf16>, vector<8x128xf32> -> vector<8x128xf32>
    %c0_14 = arith.constant 0 : index
    %c0_15 = arith.constant 0 : index
    %32 = vector.load %arg6[%c0_14, %c0_15] : memref<1x128xf32, #tpu.memory_space<vmem>>, vector<1x128xf32>
    %33 = vector.broadcast %32 : vector<1x128xf32> to vector<8x128xf32>
    %34 = arith.addf %31, %33 : vector<8x128xf32>
    %35 = arith.mulf %34, %34 : vector<8x128xf32>
    %36 = arith.mulf %35, %34 : vector<8x128xf32>
    %cst_16 = arith.constant 4.471500e-02 : f32
    %37 = vector.broadcast %cst_16 : f32 to vector<8x128xf32>
    %38 = arith.mulf %37, %36 : vector<8x128xf32>
    %39 = arith.addf %34, %38 : vector<8x128xf32>
    %cst_17 = arith.constant 0.797884583 : f32
    %40 = vector.broadcast %cst_17 : f32 to vector<8x128xf32>
    %41 = arith.mulf %40, %39 : vector<8x128xf32>
    %42 = arith.truncf %41 : vector<8x128xf32> to vector<8x128xbf16>
    %43 = math.tanh %42 : vector<8x128xbf16>
    %44 = arith.extf %43 : vector<8x128xbf16> to vector<8x128xf32>
    %cst_18 = arith.constant 5.000000e-01 : f32
    %45 = vector.broadcast %cst_18 : f32 to vector<8x128xf32>
    %46 = arith.mulf %45, %34 : vector<8x128xf32>
    %cst_19 = arith.constant 1.000000e+00 : f32
    %47 = vector.broadcast %cst_19 : f32 to vector<8x128xf32>
    %48 = arith.addf %47, %44 : vector<8x128xf32>
    %49 = arith.mulf %46, %48 : vector<8x128xf32>
    %50 = arith.truncf %49 : vector<8x128xf32> to vector<8x128xbf16>
    %c0_20 = arith.constant 0 : index
    %c0_21 = arith.constant 0 : index
    %51 = vector.load %arg7[%c0_20, %c0_21] : memref<128x8xbf16, #tpu.memory_space<vmem>>, vector<128x8xbf16>
    %cst_22 = arith.constant dense<0.000000e+00> : vector<8x8xf32>
    %52 = tpu.matmul %50, %51, %cst_22 {dimension_numbers = #tpu.dot_dimension_numbers<[1], [0], [0], [1], [0, 0, 1, 1], [], []>} : vector<8x128xbf16>, vector<128x8xbf16>, vector<8x8xf32> -> vector<8x8xf32>
    %c0_23 = arith.constant 0 : index
    %c0_24 = arith.constant 0 : index
    %53 = vector.load %arg8[%c0_23, %c0_24] : memref<1x8xf32, #tpu.memory_space<vmem>>, vector<1x8xf32>
    %54 = vector.broadcast %53 : vector<1x8xf32> to vector<8x8xf32>
    %55 = arith.addf %52, %54 : vector<8x8xf32>
    %c0_25 = arith.constant 0 : index
    %c0_26 = arith.constant 0 : index
    %56 = vector.load %arg9[%c0_25, %c0_26] : memref<8x8xf32, #tpu.memory_space<vmem>>, vector<8x8xf32>
    tpu.vector_store %arg9[%c0_25, %c0_26], %55 {strides = array<i32>} : memref<8x8xf32, #tpu.memory_space<vmem>>, vector<8x8xf32>,
    return
  }
  func.func @transform_0(%arg0: i32) -> (i32, i32) {
    %c0_i32 = arith.constant 0 : i32
    %c0_i32_0 = arith.constant 0 : i32
    return %arg0, %c0_i32 : i32, i32
  }
  func.func @transform_1(%arg0: i32) -> (i32, i32) {
    %c0_i32 = arith.constant 0 : i32
    %c0_i32_0 = arith.constant 0 : i32
    %c0_i32_1 = arith.constant 0 : i32
    return %c0_i32, %c0_i32_0 : i32, i32
  }
  func.func @transform_2(%arg0: i32) -> (i32, i32) {
    %c0_i32 = arith.constant 0 : i32
    %c0_i32_0 = arith.constant 0 : i32
    %c0_i32_1 = arith.constant 0 : i32
    return %c0_i32, %c0_i32_0 : i32, i32
  }
  func.func @transform_3(%arg0: i32) -> (i32, i32) {
    %c0_i32 = arith.constant 0 : i32
    %c0_i32_0 = arith.constant 0 : i32
    %c0_i32_1 = arith.constant 0 : i32
    return %c0_i32, %c0_i32_0 : i32, i32
  }
  func.func @transform_4(%arg0: i32) -> (i32, i32) {
    %c0_i32 = arith.constant 0 : i32
    %c0_i32_0 = arith.constant 0 : i32
    %c0_i32_1 = arith.constant 0 : i32
    return %c0_i32, %c0_i32_0 : i32, i32
  }
  func.func @transform_5(%arg0: i32) -> (i32, i32) {
    %c0_i32 = arith.constant 0 : i32
    %c0_i32_0 = arith.constant 0 : i32
    %c0_i32_1 = arith.constant 0 : i32
    return %c0_i32, %c0_i32_0 : i32, i32
  }
  func.func @transform_6(%arg0: i32) -> (i32, i32) {
    %c0_i32 = arith.constant 0 : i32
    %c0_i32_0 = arith.constant 0 : i32
    %c0_i32_1 = arith.constant 0 : i32
    return %c0_i32, %c0_i32_0 : i32, i32
  }
  func.func @transform_7(%arg0: i32) -> (i32, i32) {
    %c0_i32 = arith.constant 0 : i32
    %c0_i32_0 = arith.constant 0 : i32
    %c0_i32_1 = arith.constant 0 : i32
    return %c0_i32, %c0_i32_0 : i32, i32
  }
  func.func @transform_8(%arg0: i32) -> (i32, i32) {
    %c0_i32 = arith.constant 0 : i32
    %c0_i32_0 = arith.constant 0 : i32
    return %arg0, %c0_i32 : i32, i32
  }
}

</mosaic_0001>

<llo_original>
// kernel: _lambda_.1
$region0: #{_lambda_.1}
  #allocation0 [shape = 'u32[]', space=smem, size = 0x4, offset = 0x4, fixed_abs, tag = 'smem constant byte address 0x4 - core index']
  #allocation1 [shape = 'u32[144,128]{1,0:T(1,128)}', space=vmem, size = 0x12000, scoped, tag = 'internal scratch']
  %s0 = inlined_call_operand.vmem [shape: f32[8,1], index: 0, kind: input, shape index: {}]
  %s1 = inlined_call_operand.vmem [shape: f32[1,128], index: 1, kind: input, shape index: {}]
  %s2 = inlined_call_operand.hbm [shape: bf16[256,128], index: 2, kind: input, shape index: {}]
  %s3 = inlined_call_operand.vmem [shape: f32[1,128], index: 3, kind: input, shape index: {}]
  %s4 = inlined_call_operand.vmem [shape: bf16[128,128], index: 4, kind: input, shape index: {}]
  %s5 = inlined_call_operand.vmem [shape: f32[1,128], index: 5, kind: input, shape index: {}]
  %s6 = inlined_call_operand.hbm [shape: bf16[128,8], index: 6, kind: input, shape index: {}]
  %s7 = inlined_call_operand.vmem [shape: f32[1,8], index: 7, kind: input, shape index: {}]
  %s8 = inlined_call_operand.vmem [shape: f32[8,8], index: 8, kind: output, shape index: {}]
  %s9 = sld [smem:[#allocation0]]
  $region50: #{_lambda_.1} parent=0
    _
  %s11 = ssub.s32 1, %s9
  %s12 = scalar_select 0, %s11, %s9
  $region1: #{_lambda_.1} parent=0
    #allocation2 [shape = 'u8[65536]{0}', space=vmem, size = 0x10000, scoped, tag = 'input window, operand 2, single buffered']
    #allocation3 [shape = 's32[1]{0}', space=sflag, size = 0x4, scoped, tag = 'scoped memory for _lambda_.1']
    #allocation4 [shape = 'u8[32768]{0}', space=vmem, size = 0x8000, scoped, tag = 'input window, operand 6, single buffered']
    #allocation5 [shape = 's32[1]{0}', space=sflag, size = 0x4, scoped, tag = 'scoped memory for _lambda_.1']
    %13 = vsyncpa [#allocation3], 0
    %14 = vsyncpa [#allocation5], 0
    // Predicated region
    $region2: #{_lambda_.1} parent=1 // pred_check
      _
    $region3: #{_lambda_.1} parent=1 // pred_check_branch
      %16 = sbr.rel (0) target = $region5
    $region4: #{_lambda_.1} parent=1 // pred_region
      _
    $region5: #{_lambda_.1} parent=1 // pred_fallthru
      _
    // Predicated region
    $region6: #{_lambda_.1} parent=1 // pred_check
      _
    $region7: #{_lambda_.1} parent=1 // pred_check_branch
      %18 = sbr.rel (0) target = $region9
    $region8: #{_lambda_.1} parent=1 // pred_region
      _
    $region9: #{_lambda_.1} parent=1 // pred_fallthru
      _
    // Predicated region
    $region10: #{_lambda_.1} parent=1 // pred_check
      _
    $region11: #{_lambda_.1} parent=1 // pred_check_branch
      %20 = sbr.rel (0) target = $region13
    $region12: #{_lambda_.1} parent=1 // pred_region
      %s22 = ssub.s32 2048, 2048
      %23 = vsyncadd [#allocation3], %s22
      %s24 = sshll.u32 [#allocation2], 4
      %s25 = int_to_ptr.vmem [resolvable:$true] %s24
      %30 = dma.hbm_to_vmem [thread:$0]  %s2, 2048, %s25, [#allocation3], 64, 64, 4
    $region13: #{_lambda_.1} parent=1 // pred_fallthru
      _
    // Predicated region
    $region14: #{_lambda_.1} parent=1 // pred_check
      _
    $region15: #{_lambda_.1} parent=1 // pred_check_branch
      %32 = sbr.rel (0) target = $region17
    $region16: #{_lambda_.1} parent=1 // pred_region
      _
    $region17: #{_lambda_.1} parent=1 // pred_fallthru
      _
    // Predicated region
    $region18: #{_lambda_.1} parent=1 // pred_check
      _
    $region19: #{_lambda_.1} parent=1 // pred_check_branch
      %34 = sbr.rel (0) target = $region21
    $region20: #{_lambda_.1} parent=1 // pred_region
      _
    $region21: #{_lambda_.1} parent=1 // pred_fallthru
      _
    // Predicated region
    $region22: #{_lambda_.1} parent=1 // pred_check
      _
    $region23: #{_lambda_.1} parent=1 // pred_check_branch
      %36 = sbr.rel (0) target = $region25
    $region24: #{_lambda_.1} parent=1 // pred_region
      _
    $region25: #{_lambda_.1} parent=1 // pred_fallthru
      _
    // Predicated region
    $region26: #{_lambda_.1} parent=1 // pred_check
      _
    $region27: #{_lambda_.1} parent=1 // pred_check_branch
      %38 = sbr.rel (0) target = $region29
    $region28: #{_lambda_.1} parent=1 // pred_region
      %s40 = ssub.s32 1024, 1024
      %41 = vsyncadd [#allocation5], %s40
      %s42 = sshll.u32 [#allocation4], 4
      %s43 = int_to_ptr.vmem [resolvable:$true] %s42
      %48 = dma.hbm_to_vmem [thread:$0]  %s6, 1024, %s43, [#allocation5], 64, 64, 4
    $region29: #{_lambda_.1} parent=1 // pred_fallthru
      _
    // Predicated region
    $region30: #{_lambda_.1} parent=1 // pred_check
      _
    $region31: #{_lambda_.1} parent=1 // pred_check_branch
      %50 = sbr.rel (0) target = $region33
    $region32: #{_lambda_.1} parent=1 // pred_region
      _
    $region33: #{_lambda_.1} parent=1 // pred_fallthru
      _
    // Predicated region
    $region34: #{_lambda_.1} parent=1 // pred_check
      _
    $region35: #{_lambda_.1} parent=1 // pred_check_branch
      %52 = sbr.rel (0) target = $region37
    $region36: #{_lambda_.1} parent=1 // pred_region
      %53 = dma.done [#allocation3], 2048
    $region37: #{_lambda_.1} parent=1 // pred_fallthru
      _
    // Predicated region
    $region38: #{_lambda_.1} parent=1 // pred_check
      _
    $region39: #{_lambda_.1} parent=1 // pred_check_branch
      %55 = sbr.rel (0) target = $region41
    $region40: #{_lambda_.1} parent=1 // pred_region
      %56 = dma.done [#allocation5], 1024
    $region41: #{_lambda_.1} parent=1 // pred_fallthru
      _
    %v58 = vld [vmem:[%s0] sm:$0xff]
    %v59 = vld [vmem:[%s1] sm:$0x1]
    %61 = vset.pattern.permute.xlu0 0
    %62 = vperm.xlu0 %61, %v58
    %v63 = vpop.permute.xlu0 %62
    %v66 = vlaneseq
    %v67 = vshrl.u32 %v66, 7
    %v68 = vsub.s32 0, %v67
    %v69 = vrot.slane %v59, %v68
    %v71 = vmul.f32 %v63, %v69
    %v72 = vand.u32 2147483647, %v71
    %vm73 = vcmp.le.f32.partialorder %v72, 0.7853982
    %vm74 = vcmp.lt.s32.totalorder %v71, 0
    %v75 = vand.u32 %v71, 2139095040
    %v76 = vshrl.u32 %v75, 23
    %v77 = vsub.s32 %v76, 127
    %v78 = vand.u32 2147483647, %v71
    %v79 = vand.u32 %v78, 8388607
    %v80 = vor.u32 %v79, 8388608
    %v81 = vsub.s32 0, %v80
    %v82 = vadd.s32 %v77, 1
    %vm83 = vcmp.gt.s32.totalorder %v82, 0
    %v84 = vsel %vm83, %v82, 0
    %v85 = vshrl.u32 %v84, 5
    %v86 = vand.u32 %v84, 31
    %v87 = vsub.s32 32, %v86
    %v88 = vshrl.u32 683565275, %v87
    %v89 = vshll.u32 683565275, %v86
    %v90 = vshrl.u32 2475754826, %v87
    %v91 = vor.u32 %v89, %v90
    %v92 = vshll.u32 2475754826, %v86
    %v93 = vshrl.u32 2131351028, %v87
    %v94 = vor.u32 %v92, %v93
    %v95 = vshll.u32 2131351028, %v86
    %v96 = vshrl.u32 2102212464, %v87
    %v97 = vor.u32 %v95, %v96
    %v98 = vshll.u32 2102212464, %v86
    %v99 = vshrl.u32 920167782, %v87
    %v100 = vor.u32 %v98, %v99
    %v101 = vshll.u32 920167782, %v86
    %v102 = vshrl.u32 1326507024, %v87
    %v103 = vor.u32 %v101, %v102
    %vm104 = vcmp.lt.s32.totalorder %v85, 1
    %vm105 = vcmp.lt.s32.totalorder %v85, 2
    %vm106 = vcmp.lt.s32.totalorder %v85, 3
    %vm107 = vcmp.lt.s32.totalorder %v85, 4
    %v108 = vsel %vm104, %v88, %v91
    %v109 = vsel %vm107, %v97, 2102212464
    %v110 = vsel %vm106, %v94, %v109
    %v111 = vsel %vm105, %v108, %v110
    %v112 = vsel %vm104, %v91, %v94
    %v113 = vsel %vm107, %v100, 920167782
    %v114 = vsel %vm106, %v97, %v113
    %v115 = vsel %vm105, %v112, %v114
    %v116 = vsel %vm104, %v94, %v97
    %v117 = vsel %vm107, %v103, 1326507024
    %v118 = vsel %vm106, %v100, %v117
    %v119 = vsel %vm105, %v116, %v118
    %v120 = vshll.u32 %v80, 8
    %v121 = vmul.u32.u64.compose %v120, %v119
    %v122 = vextract.low.u32 %v121
    %v123 = vextract.high.u32 %v121
    %v124 = vmul.u32.u64.compose %v120, %v115
    %v125 = vextract.low.u32 %v124
    %v126 = vextract.high.u32 %v124
    %v127 = vmul.u32 %v120, %v111
    %v128 = vadd.s32 %v123, %v125
    %vm129 = vc.u32 %v123, %v125
    %v130 = vadd.s32 %v126, 1
    %v131 = vsel %vm129, %v130, %v126
    %v132 = vadd.s32 %v127, %v131
    %v133 = vadd.s32 %v132, 536870912
    %v134 = vshrl.u32 %v133, 30
    %v135 = vshll.u32 %v134, 30
    %v136 = vsub.s32 %v132, %v135
    %vm137 = vcmp.lt.s32.totalorder %v136, 0
    %v138 = vsub.s32 0, %v136
    %v139 = vsel %vm137, %v138, %v136
    %v140 = vclz %v139
    %v141 = vsub.s32 %v140, 2
    %vm142 = vcmp.gt.s32.totalorder 0, %v141
    %v143 = vsel %vm142, 0, %v141
    %v144 = vsub.s32 32, %v143
    %v145 = vshll.u32 %v136, %v143
    %v146 = vshrl.u32 %v128, %v144
    %v147 = vor.u32 %v145, %v146
    %v148 = vsub.s32 4294967266, %v143
    %v149 = vadd.s32 %v148, 127
    %v150 = vshll.u32 %v149, 23
    %v151 = vor.u32 4788187, %v150
    %v152 = vand.u32 2147483647, %v151
    %v154 = vcvt.s32.f32 %v147
    %v155 = vmul.f32 %v154, %v152
    %v156 = vxor.u32 %v155, 2147483648
    %v157 = vsel %vm74, %v156, %v155
    %v158 = vsub.s32 4, %v134
    %v159 = vsel %vm74, %v158, %v134
    %v160 = vsel %vm73, %v71, %v157
    %v161 = vsel %vm73, 0, %v159
    %v162 = vcosq.f32.pop %v160
    %v163 = vsinq.f32.pop %v160
    %vm164 = vweird.f32 %v71
    %v165 = vadd.s32 %v161, 3
    %v166 = vand.u32 %v165, 3
    %vm167 = vcmp.lt.s32.totalorder %v166, 2
    %vm168 = vcmp.eq.s32.totalorder %v166, 0
    %v169 = vxor.u32 %v163, 2147483648
    %v170 = vsel %vm168, %v162, %v169
    %vm171 = vcmp.eq.s32.totalorder %v166, 2
    %v172 = vxor.u32 %v162, 2147483648
    %v173 = vsel %vm171, %v172, %v163
    %v174 = vsel %vm167, %v170, %v173
    %v175 = vsel %vm164, nan, %v174
    %v176 = vand.u32 2147483647, %v71
    %vm177 = vcmp.le.f32.partialorder %v176, 0.7853982
    %vm178 = vcmp.lt.s32.totalorder %v71, 0
    %v179 = vand.u32 %v71, 2139095040
    %v180 = vshrl.u32 %v179, 23
    %v181 = vsub.s32 %v180, 127
    %v182 = vand.u32 2147483647, %v71
    %v183 = vand.u32 %v182, 8388607
    %v184 = vor.u32 %v183, 8388608
    %v185 = vsub.s32 0, %v184
    %v186 = vadd.s32 %v181, 1
    %vm187 = vcmp.gt.s32.totalorder %v186, 0
    %v188 = vsel %vm187, %v186, 0
    %v189 = vshrl.u32 %v188, 5
    %v190 = vand.u32 %v188, 31
    %v191 = vsub.s32 32, %v190
    %v192 = vshrl.u32 683565275, %v191
    %v193 = vshll.u32 683565275, %v190
    %v194 = vshrl.u32 2475754826, %v191
    %v195 = vor.u32 %v193, %v194
    %v196 = vshll.u32 2475754826, %v190
    %v197 = vshrl.u32 2131351028, %v191
    %v198 = vor.u32 %v196, %v197
    %v199 = vshll.u32 2131351028, %v190
    %v200 = vshrl.u32 2102212464, %v191
    %v201 = vor.u32 %v199, %v200
    %v202 = vshll.u32 2102212464, %v190
    %v203 = vshrl.u32 920167782, %v191
    %v204 = vor.u32 %v202, %v203
    %v205 = vshll.u32 920167782, %v190
    %v206 = vshrl.u32 1326507024, %v191
    %v207 = vor.u32 %v205, %v206
    %vm208 = vcmp.lt.s32.totalorder %v189, 1
    %vm209 = vcmp.lt.s32.totalorder %v189, 2
    %vm210 = vcmp.lt.s32.totalorder %v189, 3
    %vm211 = vcmp.lt.s32.totalorder %v189, 4
    %v212 = vsel %vm208, %v192, %v195
    %v213 = vsel %vm211, %v201, 2102212464
    %v214 = vsel %vm210, %v198, %v213
    %v215 = vsel %vm209, %v212, %v214
    %v216 = vsel %vm208, %v195, %v198
    %v217 = vsel %vm211, %v204, 920167782
    %v218 = vsel %vm210, %v201, %v217
    %v219 = vsel %vm209, %v216, %v218
    %v220 = vsel %vm208, %v198, %v201
    %v221 = vsel %vm211, %v207, 1326507024
    %v222 = vsel %vm210, %v204, %v221
    %v223 = vsel %vm209, %v220, %v222
    %v224 = vshll.u32 %v184, 8
    %v225 = vmul.u32.u64.compose %v224, %v223
    %v226 = vextract.low.u32 %v225
    %v227 = vextract.high.u32 %v225
    %v228 = vmul.u32.u64.compose %v224, %v219
    %v229 = vextract.low.u32 %v228
    %v230 = vextract.high.u32 %v228
    %v231 = vmul.u32 %v224, %v215
    %v232 = vadd.s32 %v227, %v229
    %vm233 = vc.u32 %v227, %v229
    %v234 = vadd.s32 %v230, 1
    %v235 = vsel %vm233, %v234, %v230
    %v236 = vadd.s32 %v231, %v235
    %v237 = vadd.s32 %v236, 536870912
    %v238 = vshrl.u32 %v237, 30
    %v239 = vshll.u32 %v238, 30
    %v240 = vsub.s32 %v236, %v239
    %vm241 = vcmp.lt.s32.totalorder %v240, 0
    %v242 = vsub.s32 0, %v240
    %v243 = vsel %vm241, %v242, %v240
    %v244 = vclz %v243
    %v245 = vsub.s32 %v244, 2
    %vm246 = vcmp.gt.s32.totalorder 0, %v245
    %v247 = vsel %vm246, 0, %v245
    %v248 = vsub.s32 32, %v247
    %v249 = vshll.u32 %v240, %v247
    %v250 = vshrl.u32 %v232, %v248
    %v251 = vor.u32 %v249, %v250
    %v252 = vsub.s32 4294967266, %v247
    %v253 = vadd.s32 %v252, 127
    %v254 = vshll.u32 %v253, 23
    %v255 = vor.u32 4788187, %v254
    %v256 = vand.u32 2147483647, %v255
    %v258 = vcvt.s32.f32 %v251
    %v259 = vmul.f32 %v258, %v256
    %v260 = vxor.u32 %v259, 2147483648
    %v261 = vsel %vm178, %v260, %v259
    %v262 = vsub.s32 4, %v238
    %v263 = vsel %vm178, %v262, %v238
    %v264 = vsel %vm177, %v71, %v261
    %v265 = vsel %vm177, 0, %v263
    %v266 = vcosq.f32.pop %v264
    %v267 = vsinq.f32.pop %v264
    %vm268 = vweird.f32 %v71
    %v269 = vand.u32 %v265, 3
    %vm270 = vcmp.lt.s32.totalorder %v269, 2
    %vm271 = vcmp.eq.s32.totalorder %v269, 0
    %v272 = vxor.u32 %v267, 2147483648
    %v273 = vsel %vm271, %v266, %v272
    %vm274 = vcmp.eq.s32.totalorder %v269, 2
    %v275 = vxor.u32 %v266, 2147483648
    %v276 = vsel %vm274, %v275, %v267
    %v277 = vsel %vm270, %v273, %v276
    %v278 = vsel %vm268, nan, %v277
    %v279 = vpack.c.bf16 %v175, %v175
    %v280 = vpack.c.bf16 %v278, %v278
    %v281 = vld [vmem:[#allocation2] sm:$0xf]
    %v282 = vld [vmem:[#allocation2 + $0x4] sm:$0xf]
    %v283 = vld [vmem:[#allocation2 + $0x8] sm:$0xf]
    %v284 = vld [vmem:[#allocation2 + $0xc] sm:$0xf]
    %v285 = vld [vmem:[#allocation2 + $0x10] sm:$0xf]
    %v286 = vld [vmem:[#allocation2 + $0x14] sm:$0xf]
    %v287 = vld [vmem:[#allocation2 + $0x18] sm:$0xf]
    %v288 = vld [vmem:[#allocation2 + $0x1c] sm:$0xf]
    %v289 = vld [vmem:[#allocation2 + $0x20] sm:$0xf]
    %v290 = vld [vmem:[#allocation2 + $0x24] sm:$0xf]
    %v291 = vld [vmem:[#allocation2 + $0x28] sm:$0xf]
    %v292 = vld [vmem:[#allocation2 + $0x2c] sm:$0xf]
    %v293 = vld [vmem:[#allocation2 + $0x30] sm:$0xf]
    %v294 = vld [vmem:[#allocation2 + $0x34] sm:$0xf]
    %v295 = vld [vmem:[#allocation2 + $0x38] sm:$0xf]
    %v296 = vld [vmem:[#allocation2 + $0x3c] sm:$0xf]
    %v297 = vld [vmem:[#allocation2 + $0x40] sm:$0xf]
    %v298 = vld [vmem:[#allocation2 + $0x44] sm:$0xf]
    %v299 = vld [vmem:[#allocation2 + $0x48] sm:$0xf]
    %v300 = vld [vmem:[#allocation2 + $0x4c] sm:$0xf]
    %v301 = vld [vmem:[#allocation2 + $0x50] sm:$0xf]
    %v302 = vld [vmem:[#allocation2 + $0x54] sm:$0xf]
    %v303 = vld [vmem:[#allocation2 + $0x58] sm:$0xf]
    %v304 = vld [vmem:[#allocation2 + $0x5c] sm:$0xf]
    %v305 = vld [vmem:[#allocation2 + $0x60] sm:$0xf]
    %v306 = vld [vmem:[#allocation2 + $0x64] sm:$0xf]
    %v307 = vld [vmem:[#allocation2 + $0x68] sm:$0xf]
    %v308 = vld [vmem:[#allocation2 + $0x6c] sm:$0xf]
    %v309 = vld [vmem:[#allocation2 + $0x70] sm:$0xf]
    %v310 = vld [vmem:[#allocation2 + $0x74] sm:$0xf]
    %v311 = vld [vmem:[#allocation2 + $0x78] sm:$0xf]
    %v312 = vld [vmem:[#allocation2 + $0x7c] sm:$0xf]
    %v313 = vld [vmem:[%s3] sm:$0x1]
    %v315 = vlaneseq
    %v316 = vshrl.u32 %v315, 7
    %v317 = vsub.s32 0, %v316
    %v318 = vrot.slane %v313, %v317
    %v352 = vunpack.c.l.b16 %v281
    %v353 = vunpack.c.l.b16 %v282
    %v354 = vunpack.c.l.b16 %v283
    %v355 = vunpack.c.l.b16 %v284
    %v356 = vunpack.c.l.b16 %v285
    %v357 = vunpack.c.l.b16 %v286
    %v358 = vunpack.c.l.b16 %v287
    %v359 = vunpack.c.l.b16 %v288
    %v360 = vunpack.c.l.b16 %v289
    %v361 = vunpack.c.l.b16 %v290
    %v362 = vunpack.c.l.b16 %v291
    %v363 = vunpack.c.l.b16 %v292
    %v364 = vunpack.c.l.b16 %v293
    %v365 = vunpack.c.l.b16 %v294
    %v366 = vunpack.c.l.b16 %v295
    %v367 = vunpack.c.l.b16 %v296
    %v368 = vunpack.c.l.b16 %v297
    %v369 = vunpack.c.l.b16 %v298
    %v370 = vunpack.c.l.b16 %v299
    %v371 = vunpack.c.l.b16 %v300
    %v372 = vunpack.c.l.b16 %v301
    %v373 = vunpack.c.l.b16 %v302
    %v374 = vunpack.c.l.b16 %v303
    %v375 = vunpack.c.l.b16 %v304
    %v376 = vunpack.c.l.b16 %v305
    %v377 = vunpack.c.l.b16 %v306
    %v378 = vunpack.c.l.b16 %v307
    %v379 = vunpack.c.l.b16 %v308
    %v380 = vunpack.c.l.b16 %v309
    %v381 = vunpack.c.l.b16 %v310
    %v382 = vunpack.c.l.b16 %v311
    %v383 = vunpack.c.l.b16 %v312
    %v384 = vpack.c.b16 %v353, %v352
    %v385 = vpack.c.b16 %v355, %v354
    %v386 = vpack.c.b16 %v357, %v356
    %v387 = vpack.c.b16 %v359, %v358
    %v388 = vpack.c.b16 %v361, %v360
    %v389 = vpack.c.b16 %v363, %v362
    %v390 = vpack.c.b16 %v365, %v364
    %v391 = vpack.c.b16 %v367, %v366
    %v392 = vpack.c.b16 %v369, %v368
    %v393 = vpack.c.b16 %v371, %v370
    %v394 = vpack.c.b16 %v373, %v372
    %v395 = vpack.c.b16 %v375, %v374
    %v396 = vpack.c.b16 %v377, %v376
    %v397 = vpack.c.b16 %v379, %v378
    %v398 = vpack.c.b16 %v381, %v380
    %v399 = vpack.c.b16 %v383, %v382
    %416 = vmatprep.subr.bf16.mxu0 0
    %417 = vmatpush1.bf16.msra.mxu0 %v384
    %418 = vmatprep.subr.bf16.mxu0 0
    %419 = vmatpush1.bf16.msra.mxu0 %v385
    %420 = vmatprep.subr.bf16.mxu0 0
    %421 = vmatpush1.bf16.msra.mxu0 %v386
    %422 = vmatprep.subr.bf16.mxu0 0
    %423 = vmatpush1.bf16.msra.mxu0 %v387
    %424 = vmatprep.subr.bf16.mxu0 0
    %425 = vmatpush1.bf16.msra.mxu0 %v388
    %426 = vmatprep.subr.bf16.mxu0 0
    %427 = vmatpush1.bf16.msra.mxu0 %v389
    %428 = vmatprep.subr.bf16.mxu0 0
    %429 = vmatpush1.bf16.msra.mxu0 %v390
    %430 = vmatprep.subr.bf16.mxu0 0
    %431 = vmatpush1.bf16.msra.mxu0 %v391
    %432 = vmatprep.subr.bf16.mxu0 0
    %433 = vmatpush1.bf16.msra.mxu0 %v392
    %434 = vmatprep.subr.bf16.mxu0 0
    %435 = vmatpush1.bf16.msra.mxu0 %v393
    %436 = vmatprep.subr.bf16.mxu0 0
    %437 = vmatpush1.bf16.msra.mxu0 %v394
    %438 = vmatprep.subr.bf16.mxu0 0
    %439 = vmatpush1.bf16.msra.mxu0 %v395
    %440 = vmatprep.subr.bf16.mxu0 0
    %441 = vmatpush1.bf16.msra.mxu0 %v396
    %442 = vmatprep.subr.bf16.mxu0 0
    %443 = vmatpush1.bf16.msra.mxu0 %v397
    %444 = vmatprep.subr.bf16.mxu0 0
    %445 = vmatpush1.bf16.msra.mxu0 %v398
    %446 = vmatprep.subr.bf16.mxu0 0
    %447 = vmatpush1.bf16.msra.mxu0 %v399
    %448 = vmatprep.mubr.bf16.mxu0 %v280
    %449 = vmatmul.mubr.bf16.gmra.mrb[0].mxu0 %v279
    %v450 = vpop.f32.mrb[0].mxu0
    %v451 = vadd.f32 %v318, %v450
    %v452 = vpop.f32.mrb[0].mxu0
    %v453 = vpop.f32.mrb[0].mxu0
    %v454 = vpop.f32.mrb[0].mxu0
    %455 = vdwg.mxu0
    %v456 = vmul.f32 %v451, %v451
    %v457 = vmul.f32 %v456, %v451
    %v458 = vmul.f32 %v457, 0.044715
    %v459 = vadd.f32 %v451, %v458
    %v460 = vmul.f32 %v459, 0.7978846
    %v461 = vpack.c.bf16 %v460, %v460
    %v462 = vtanh.bf16.pop %v461
    %v463 = vunpack.c.l.bf16 %v462
    %v464 = vmul.f32 %v451, 0.5
    %v465 = vadd.f32 %v463, 1.0
    %v466 = vmul.f32 %v464, %v465
    %v467 = vpack.c.bf16 %v466, %v466
    %v468 = vld [vmem:[%s4] sm:$0xf]
    %v469 = vld [vmem:[%s4 + $0x4] sm:$0xf]
    %v470 = vld [vmem:[%s4 + $0x8] sm:$0xf]
    %v471 = vld [vmem:[%s4 + $0xc] sm:$0xf]
    %v472 = vld [vmem:[%s4 + $0x10] sm:$0xf]
    %v473 = vld [vmem:[%s4 + $0x14] sm:$0xf]
    %v474 = vld [vmem:[%s4 + $0x18] sm:$0xf]
    %v475 = vld [vmem:[%s4 + $0x1c] sm:$0xf]
    %v476 = vld [vmem:[%s4 + $0x20] sm:$0xf]
    %v477 = vld [vmem:[%s4 + $0x24] sm:$0xf]
    %v478 = vld [vmem:[%s4 + $0x28] sm:$0xf]
    %v479 = vld [vmem:[%s4 + $0x2c] sm:$0xf]
    %v480 = vld [vmem:[%s4 + $0x30] sm:$0xf]
    %v481 = vld [vmem:[%s4 + $0x34] sm:$0xf]
    %v482 = vld [vmem:[%s4 + $0x38] sm:$0xf]
    %v483 = vld [vmem:[%s4 + $0x3c] sm:$0xf]
    %v484 = vld [vmem:[%s5] sm:$0x1]
    %v486 = vlaneseq
    %v487 = vshrl.u32 %v486, 7
    %v488 = vsub.s32 0, %v487
    %v489 = vrot.slane %v484, %v488
    %v507 = vunpack.c.l.b16 %v468
    %v508 = vunpack.c.l.b16 %v469
    %v509 = vunpack.c.l.b16 %v470
    %v510 = vunpack.c.l.b16 %v471
    %v511 = vunpack.c.l.b16 %v472
    %v512 = vunpack.c.l.b16 %v473
    %v513 = vunpack.c.l.b16 %v474
    %v514 = vunpack.c.l.b16 %v475
    %v515 = vunpack.c.l.b16 %v476
    %v516 = vunpack.c.l.b16 %v477
    %v517 = vunpack.c.l.b16 %v478
    %v518 = vunpack.c.l.b16 %v479
    %v519 = vunpack.c.l.b16 %v480
    %v520 = vunpack.c.l.b16 %v481
    %v521 = vunpack.c.l.b16 %v482
    %v522 = vunpack.c.l.b16 %v483
    %v523 = vpack.c.b16 %v508, %v507
    %v524 = vpack.c.b16 %v510, %v509
    %v525 = vpack.c.b16 %v512, %v511
    %v526 = vpack.c.b16 %v514, %v513
    %v527 = vpack.c.b16 %v516, %v515
    %v528 = vpack.c.b16 %v518, %v517
    %v529 = vpack.c.b16 %v520, %v519
    %v530 = vpack.c.b16 %v522, %v521
    %539 = vmatprep.subr.bf16.mxu0 0
    %540 = vmatpush1.bf16.msra.mxu0 %v523
    %541 = vmatprep.subr.bf16.mxu0 0
    %542 = vmatpush1.bf16.msra.mxu0 %v524
    %543 = vmatprep.subr.bf16.mxu0 0
    %544 = vmatpush1.bf16.msra.mxu0 %v525
    %545 = vmatprep.subr.bf16.mxu0 0
    %546 = vmatpush1.bf16.msra.mxu0 %v526
    %547 = vmatprep.subr.bf16.mxu0 0
    %548 = vmatpush1.bf16.msra.mxu0 %v527
    %549 = vmatprep.subr.bf16.mxu0 0
    %550 = vmatpush1.bf16.msra.mxu0 %v528
    %551 = vmatprep.subr.bf16.mxu0 0
    %552 = vmatpush1.bf16.msra.mxu0 %v529
    %553 = vmatprep.subr.bf16.mxu0 0
    %554 = vmatpush1.bf16.msra.mxu0 %v530
    %555 = vmatprep.subr.bf16.mxu0 0
    %556 = vmatpush1.bf16.msra.mxu0 0
    %557 = vmatprep.subr.bf16.mxu0 0
    %558 = vmatpush1.bf16.msra.mxu0 0
    %559 = vmatprep.subr.bf16.mxu0 0
    %560 = vmatpush1.bf16.msra.mxu0 0
    %561 = vmatprep.subr.bf16.mxu0 0
    %562 = vmatpush1.bf16.msra.mxu0 0
    %563 = vmatprep.subr.bf16.mxu0 0
    %564 = vmatpush1.bf16.msra.mxu0 0
    %565 = vmatprep.subr.bf16.mxu0 0
    %566 = vmatpush1.bf16.msra.mxu0 0
    %567 = vmatprep.subr.bf16.mxu0 0
    %568 = vmatpush1.bf16.msra.mxu0 0
    %569 = vmatprep.subr.bf16.mxu0 0
    %570 = vmatpush1.bf16.msra.mxu0 0
    %571 = vmatprep.mubr.bf16.mxu0 0
    %572 = vmatmul.mubr.bf16.gmra.mrb[0].mxu0 %v467
    %v573 = vpop.f32.mrb[0].mxu0
    %v574 = vadd.f32 %v489, %v573
    %v575 = vpop.f32.mrb[0].mxu0
    %v576 = vpop.f32.mrb[0].mxu0
    %v577 = vpop.f32.mrb[0].mxu0
    %578 = vdwg.mxu0
    %v579 = vmul.f32 %v574, %v574
    %v580 = vmul.f32 %v579, %v574
    %v581 = vmul.f32 %v580, 0.044715
    %v582 = vadd.f32 %v574, %v581
    %v583 = vmul.f32 %v582, 0.7978846
    %v584 = vpack.c.bf16 %v583, %v583
    %v585 = vtanh.bf16.pop %v584
    %v586 = vunpack.c.l.bf16 %v585
    %v587 = vmul.f32 %v574, 0.5
    %v588 = vadd.f32 %v586, 1.0
    %v589 = vmul.f32 %v587, %v588
    %v590 = vpack.c.bf16 %v589, %v589
    %v591 = vld [vmem:[#allocation4] sm:$0xf]
    %v592 = vld [vmem:[#allocation4 + $0x4] sm:$0xf]
    %v593 = vld [vmem:[#allocation4 + $0x8] sm:$0xf]
    %v594 = vld [vmem:[#allocation4 + $0xc] sm:$0xf]
    %v595 = vld [vmem:[#allocation4 + $0x10] sm:$0xf]
    %v596 = vld [vmem:[#allocation4 + $0x14] sm:$0xf]
    %v597 = vld [vmem:[#allocation4 + $0x18] sm:$0xf]
    %v598 = vld [vmem:[#allocation4 + $0x1c] sm:$0xf]
    %v599 = vld [vmem:[#allocation4 + $0x20] sm:$0xf]
    %v600 = vld [vmem:[#allocation4 + $0x24] sm:$0xf]
    %v601 = vld [vmem:[#allocation4 + $0x28] sm:$0xf]
    %v602 = vld [vmem:[#allocation4 + $0x2c] sm:$0xf]
    %v603 = vld [vmem:[#allocation4 + $0x30] sm:$0xf]
    %v604 = vld [vmem:[#allocation4 + $0x34] sm:$0xf]
    %v605 = vld [vmem:[#allocation4 + $0x38] sm:$0xf]
    %v606 = vld [vmem:[#allocation4 + $0x3c] sm:$0xf]
    %v607 = vld [vmem:[%s7] sm:$0x1]
    %v609 = vlaneseq
    %v610 = vshrl.u32 %v609, 7
    %v611 = vsub.s32 0, %v610
    %v612 = vrot.slane %v607, %v611
    %v630 = vunpack.c.l.b16 %v591
    %v631 = vunpack.c.l.b16 %v592
    %v632 = vunpack.c.l.b16 %v593
    %v633 = vunpack.c.l.b16 %v594
    %v634 = vunpack.c.l.b16 %v595
    %v635 = vunpack.c.l.b16 %v596
    %v636 = vunpack.c.l.b16 %v597
    %v637 = vunpack.c.l.b16 %v598
    %v638 = vunpack.c.l.b16 %v599
    %v639 = vunpack.c.l.b16 %v600
    %v640 = vunpack.c.l.b16 %v601
    %v641 = vunpack.c.l.b16 %v602
    %v642 = vunpack.c.l.b16 %v603
    %v643 = vunpack.c.l.b16 %v604
    %v644 = vunpack.c.l.b16 %v605
    %v645 = vunpack.c.l.b16 %v606
    %v646 = vpack.c.b16 %v631, %v630
    %v647 = vpack.c.b16 %v633, %v632
    %v648 = vpack.c.b16 %v635, %v634
    %v649 = vpack.c.b16 %v637, %v636
    %v650 = vpack.c.b16 %v639, %v638
    %v651 = vpack.c.b16 %v641, %v640
    %v652 = vpack.c.b16 %v643, %v642
    %v653 = vpack.c.b16 %v645, %v644
    %662 = vmatprep.subr.bf16.mxu0 0
    %663 = vmatpush1.bf16.msra.mxu0 %v646
    %664 = vmatprep.subr.bf16.mxu0 0
    %665 = vmatpush1.bf16.msra.mxu0 %v647
    %666 = vmatprep.subr.bf16.mxu0 0
    %667 = vmatpush1.bf16.msra.mxu0 %v648
    %668 = vmatprep.subr.bf16.mxu0 0
    %669 = vmatpush1.bf16.msra.mxu0 %v649
    %670 = vmatprep.subr.bf16.mxu0 0
    %671 = vmatpush1.bf16.msra.mxu0 %v650
    %672 = vmatprep.subr.bf16.mxu0 0
    %673 = vmatpush1.bf16.msra.mxu0 %v651
    %674 = vmatprep.subr.bf16.mxu0 0
    %675 = vmatpush1.bf16.msra.mxu0 %v652
    %676 = vmatprep.subr.bf16.mxu0 0
    %677 = vmatpush1.bf16.msra.mxu0 %v653
    %678 = vmatprep.subr.bf16.mxu0 0
    %679 = vmatpush1.bf16.msra.mxu0 0
    %680 = vmatprep.subr.bf16.mxu0 0
    %681 = vmatpush1.bf16.msra.mxu0 0
    %682 = vmatprep.subr.bf16.mxu0 0
    %683 = vmatpush1.bf16.msra.mxu0 0
    %684 = vmatprep.subr.bf16.mxu0 0
    %685 = vmatpush1.bf16.msra.mxu0 0
    %686 = vmatprep.subr.bf16.mxu0 0
    %687 = vmatpush1.bf16.msra.mxu0 0
    %688 = vmatprep.subr.bf16.mxu0 0
    %689 = vmatpush1.bf16.msra.mxu0 0
    %690 = vmatprep.subr.bf16.mxu0 0
    %691 = vmatpush1.bf16.msra.mxu0 0
    %692 = vmatprep.subr.bf16.mxu0 0
    %693 = vmatpush1.bf16.msra.mxu0 0
    %694 = vmatprep.mubr.bf16.mxu0 0
    %695 = vmatmul.mubr.bf16.gmra.mrb[0].mxu0 %v590
    %v696 = vpop.f32.mrb[0].mxu0
    %v697 = vadd.f32 %v612, %v696
    %v698 = vpop.f32.mrb[0].mxu0
    %v699 = vpop.f32.mrb[0].mxu0
    %v700 = vpop.f32.mrb[0].mxu0
    %701 = vdwg.mxu0
    %vm702 = vcmask 64512
    %703 = vst.msk [vmem:[%s8] sm:$0xff] %vm702, %v697
    // Predicated region
    $region42: #{_lambda_.1} parent=1 // pred_check
      _
    $region43: #{_lambda_.1} parent=1 // pred_check_branch
      %705 = sbr.rel (0) target = $region45
    $region44: #{_lambda_.1} parent=1 // pred_region
      _
    $region45: #{_lambda_.1} parent=1 // pred_fallthru
      _
    // Predicated region
    $region46: #{_lambda_.1} parent=1 // pred_check
      _
    $region47: #{_lambda_.1} parent=1 // pred_check_branch
      %707 = sbr.rel (0) target = $region49
    $region48: #{_lambda_.1} parent=1 // pred_region
      _
    $region49: #{_lambda_.1} parent=1 // pred_fallthru
      _
    %708 = vsyncpa [#allocation3], 1
    %709 = vsyncpa [#allocation5], 1

</llo_original>
